<compile_context>
chip_gen: v5e
topology: v5e:2x2
jax: 0.10.0
libtpu: 0.0.40
codegen_flags: <defaults>
</compile_context>

<pallas_src>
import numpy as np
import jax
import jax.numpy as jnp
from jax.experimental import pallas as pl
from jax.experimental.pallas import tpu as pltpu

_LANES = 128


# --------------------------------------------------------------------------
# Kernel: one lane-dense tile of h_swish
# --------------------------------------------------------------------------
def _h_swish_kernel(x_ref, o_ref):
    x = x_ref[...]
    # x * relu6(x + 3) / 6   (division kept to match the PyTorch forward)
    o_ref[...] = x * jnp.clip(x + 3.0, 0.0, 6.0) / 6.0


def _h_swish_jnp(x):
    return x * jnp.clip(x + 3.0, 0.0, 6.0) / 6.0


def _round_up(a, m):
    return -(-a // m) * m


def _sublane(dtype):
    itemsize = jnp.dtype(dtype).itemsize
    return 8 * max(1, 4 // itemsize)      # 8 f32 / 16 bf16 / 32 int8


def _pick_cols(n, sublane):
    """Largest cols in {512, 256, 128} with n % cols == 0 and rows >= sublane."""
    for cols in (512, 256, 128):
        if n % cols == 0 and (n // cols) >= sublane:
            return cols
    return None


# --------------------------------------------------------------------------
# Tiled pallas_call over a lane-dense (rows, cols) slab (cols % 128 == 0)
# --------------------------------------------------------------------------
def _run_tiled(x2d, *, max_block_rows):
    rows, cols = x2d.shape
    itemsize = jnp.dtype(x2d.dtype).itemsize
    sublane = _sublane(x2d.dtype)

    # Block rows: multiple of the packed-sublane tile, never larger than the
    # array, and small enough to give >= 2 grid steps (v7x megacore) when the
    # array allows it.  Partial last block is handled by Pallas edge masking.
    rows_floor = (rows // sublane) * sublane
    half = _round_up(pl.cdiv(rows, 2), sublane)
    block_rows = max(sublane, min(max_block_rows, rows_floor, half))

    grid = (pl.cdiv(rows, block_rows),)

    # in + out, double-buffered, plus headroom; capped at v7x's 64 MiB VMEM.
    block_bytes = block_rows * cols * itemsize
    vmem_limit = min(4 * block_bytes + (4 << 20), 64 << 20)

    return pl.pallas_call(
        _h_swish_kernel,
        out_shape=jax.ShapeDtypeStruct((rows, cols), x2d.dtype),
        grid_spec=pltpu.PrefetchScalarGridSpec(
            num_scalar_prefetch=0,
            grid=grid,
            in_specs=[pl.BlockSpec((block_rows, cols), lambda i: (i, 0))],
            out_specs=pl.BlockSpec((block_rows, cols), lambda i: (i, 0)),
        ),
        compiler_params=pltpu.CompilerParams(
            dimension_semantics=("parallel",),
            vmem_limit_bytes=vmem_limit,
        ),
        # NOTE: input_output_aliases={0: 0} would halve peak HBM footprint,
        # but forcing the alias makes XLA insert a defensive copy whenever the
        # slab aliases a non-donated jit parameter, so buffer donation is left
        # to the caller (jax.jit(..., donate_argnums=...)).
    )(x2d)


# --------------------------------------------------------------------------
# Wrapper
# --------------------------------------------------------------------------
def h_swish(x, *, max_block_rows=2048):
    """Elementwise h_swish via a lane-dense, zero-copy Pallas TPU kernel."""
    shape, dtype = x.shape, x.dtype
    n = x.size
    if n == 0:
        return x

    sublane = _sublane(dtype)

    # Fast path: lane-aligned size -> pure reshape (no pad / slice / concat).
    cols = _pick_cols(n, sublane)
    if cols is not None:
        out = _run_tiled(x.reshape(n // cols, cols),
                         max_block_rows=max_block_rows)
        return out.reshape(shape)

    # Ragged size: kernel over the 128-aligned bulk, plain jnp for the
    # (<128-element) tail; avoids a full-tensor pad + trailing slice.
    flat = x.reshape(n)
    bulk_n = (n // _LANES) * _LANES
    if bulk_n >= _LANES * sublane:
        bulk_cols = _pick_cols(bulk_n, sublane)
        bulk = _run_tiled(flat[:bulk_n].reshape(bulk_n // bulk_cols, bulk_cols),
                          max_block_rows=max_block_rows).reshape(bulk_n)
        tail = _h_swish_jnp(flat[bulk_n:])
        return jnp.concatenate([bulk, tail]).reshape(shape)

    # Tiny tensor (< 128 * sublane elements): kernel-launch + DMA overhead
    # dominates; fused jnp is already at roofline here.
    return _h_swish_jnp(x)


# --------------------------------------------------------------------------
# Pure-JAX reference (mirrors the PyTorch forward)
# --------------------------------------------------------------------------
def _reference(x):
    return x * jnp.clip(x + 3.0, 0.0, 6.0) / 6.0


if __name__ == "__main__":
    key = jax.random.PRNGKey(0)
    k0, k1, k2, k3 = jax.random.split(key, 4)

    # Primary test: small NCHW activation consistent with the module's usage.
    x = jax.random.normal(k0, (2, 4, 16, 16), jnp.float32) * 3.0
    out = jax.block_until_ready(h_swish(x))
    assert out.shape == x.shape and out.dtype == x.dtype, (out.shape, out.dtype)
    if not np.allclose(np.asarray(out), np.asarray(_reference(x)),
                       atol=1e-5, rtol=1e-5):
        raise RuntimeError("h_swish Pallas kernel mismatch (f32)")

    # Multi-block grid with a partial (masked) last block.
    x2 = jax.random.normal(k1, (2, 4, 64, 67), jnp.float32) * 3.0
    out2 = jax.block_until_ready(h_swish(x2))
    if not np.allclose(np.asarray(out2), np.asarray(_reference(x2)),
                       atol=1e-5, rtol=1e-5):
        raise RuntimeError("h_swish Pallas kernel mismatch (multi-block)")

    # Lane-ragged size (n % 128 != 0): kernel bulk + jnp tail path.
    x3 = jax.random.normal(k2, (3, 5, 7, 11), jnp.float32) * 3.0
    out3 = jax.block_until_ready(h_swish(x3))
    if not np.allclose(np.asarray(out3), np.asarray(_reference(x3)),
                       atol=1e-5, rtol=1e-5):
        raise RuntimeError("h_swish Pallas kernel mismatch (ragged)")

    # bf16 path (16-row packed sublane tiles).
    x4 = (jax.random.normal(k3, (2, 4, 16, 16), jnp.float32) * 3.0
          ).astype(jnp.bfloat16)
    out4 = jax.block_until_ready(h_swish(x4))
    ref4 = _reference(x4.astype(jnp.float32))
    if not np.allclose(np.asarray(out4.astype(jnp.float32)),
                       np.asarray(ref4), atol=2e-2, rtol=2e-2):
        raise RuntimeError("h_swish Pallas kernel mismatch (bf16)")

    print("KERNEL_OK")
</pallas_src>

<mosaic_0001>
module attributes {stable_mosaic.version = 11 : i64} {
  func.func @_h_swish_kernel(%arg0: i32, %arg1: memref<8x256xf32, #tpu.memory_space<vmem>>, %arg2: memref<8x256xf32, #tpu.memory_space<vmem>>) attributes {dimension_semantics = [#tpu.dimension_semantics<parallel>], iteration_bounds = array<i64: 1>, scalar_prefetch = 0 : i64, scratch_operands = 0 : i64, tpu.core_type = #tpu.core_type<tc>, window_params = [{transform_indices = @transform_0, window_bounds = array<i64: 8, 256>}, {transform_indices = @transform_1, window_bounds = array<i64: 8, 256>}]} {
    %c0 = arith.constant 0 : index
    %c0_0 = arith.constant 0 : index
    %0 = vector.load %arg1[%c0, %c0_0] : memref<8x256xf32, #tpu.memory_space<vmem>>, vector<8x256xf32>
    %cst = arith.constant 3.000000e+00 : f32
    %1 = vector.broadcast %cst : f32 to vector<8x256xf32>
    %2 = arith.addf %0, %1 : vector<8x256xf32>
    %cst_1 = arith.constant 0.000000e+00 : f32
    %cst_2 = arith.constant 6.000000e+00 : f32
    %3 = vector.broadcast %cst_1 : f32 to vector<8x256xf32>
    %4 = arith.maximumf %3, %2 : vector<8x256xf32>
    %5 = vector.broadcast %cst_2 : f32 to vector<8x256xf32>
    %6 = arith.minimumf %5, %4 : vector<8x256xf32>
    %7 = arith.mulf %0, %6 : vector<8x256xf32>
    %cst_3 = arith.constant 6.000000e+00 : f32
    %8 = vector.broadcast %cst_3 : f32 to vector<8x256xf32>
    %9 = arith.divf %7, %8 : vector<8x256xf32>
    %c0_4 = arith.constant 0 : index
    %c0_5 = arith.constant 0 : index
    %10 = vector.load %arg2[%c0_4, %c0_5] : memref<8x256xf32, #tpu.memory_space<vmem>>, vector<8x256xf32>
    tpu.vector_store %arg2[%c0_4, %c0_5], %9 {strides = array<i32>} : memref<8x256xf32, #tpu.memory_space<vmem>>, vector<8x256xf32>,
    return
  }
  func.func @transform_0(%arg0: i32) -> (i32, i32) {
    %c0_i32 = arith.constant 0 : i32
    %c0_i32_0 = arith.constant 0 : i32
    return %arg0, %c0_i32 : i32, i32
  }
  func.func @transform_1(%arg0: i32) -> (i32, i32) {
    %c0_i32 = arith.constant 0 : i32
    %c0_i32_0 = arith.constant 0 : i32
    return %arg0, %c0_i32 : i32, i32
  }
}

</mosaic_0001>

<llo_original>
// kernel: tpu_custom_call.1
$region0: #{tpu_custom_call.1}
  #allocation0 [shape = 'u32[]', space=smem, size = 0x4, offset = 0x4, fixed_abs, tag = 'smem constant byte address 0x4 - core index']
  #allocation1 [shape = 'u32[72,128]{1,0:T(1,128)}', space=vmem, size = 0x9000, scoped, tag = 'internal scratch']
  %s0 = inlined_call_operand.hbm [shape: f32[8,256], index: 0, kind: input, shape index: {}]
  %s1 = inlined_call_operand.hbm [shape: f32[8,256], index: 1, kind: output, shape index: {}]
  %s2 = sld [smem:[#allocation0]]
  $region18: #{tpu_custom_call.1} parent=0
    _
  %s4 = ssub.s32 1, %s2
  %s5 = scalar_select 0, %s4, %s2
  $region1: #{tpu_custom_call.1} parent=0
    #allocation2 [shape = 'u8[8192]{0}', space=vmem, size = 0x2000, scoped, tag = 'input window, operand 0, single buffered']
    #allocation3 [shape = 's32[1]{0}', space=sflag, size = 0x4, scoped, tag = 'scoped memory for tpu_custom_call.1']
    #allocation4 [shape = 's32[1]{0}', space=sflag, size = 0x4, scoped, tag = 'scoped memory for tpu_custom_call.1']
    #allocation5 [shape = 'u8[8192]{0}', space=vmem, size = 0x2000, scoped, tag = 'output window, operand 0, single buffered']
    %6 = vsyncpa [#allocation3], 0
    %7 = vsyncpa [#allocation4], 0
    // Predicated region
    $region2: #{tpu_custom_call.1} parent=1 // pred_check
      _
    $region3: #{tpu_custom_call.1} parent=1 // pred_check_branch
      %9 = sbr.rel (0) target = $region5
    $region4: #{tpu_custom_call.1} parent=1 // pred_region
      %11 = vsyncadd [#allocation3], 0
      %s13 = sshll.u32 %s0, 4
      %s14 = int_to_ptr.hbm [resolvable:$true] %s13
      %s15 = sshll.u32 [#allocation2], 4
      %s16 = int_to_ptr.vmem [resolvable:$true] %s15
      %18 = dma.hbm_to_vmem [thread:$0]  %s14, 256, %s16, [#allocation3]
    $region5: #{tpu_custom_call.1} parent=1 // pred_fallthru
      _
    // Predicated region
    $region6: #{tpu_custom_call.1} parent=1 // pred_check
      _
    $region7: #{tpu_custom_call.1} parent=1 // pred_check_branch
      %20 = sbr.rel (0) target = $region9
    $region8: #{tpu_custom_call.1} parent=1 // pred_region
      %22 = dma.done [#allocation3], 256
    $region9: #{tpu_custom_call.1} parent=1 // pred_fallthru
      _
    %v23 = vld [vmem:[#allocation2] sm:$0xff]
    %v24 = vld [vmem:[#allocation2 + $0x8] sm:$0xff]
    %v25 = vadd.f32 %v23, 3.0
    %v26 = vadd.f32 %v24, 3.0
    %v27 = vmax.f32 %v25, 0.0
    %v28 = vmax.f32 %v26, 0.0
    %v29 = vmin.f32 %v27, 6.0
    %v30 = vmin.f32 %v28, 6.0
    %v31 = vmul.f32 %v23, %v29
    %v32 = vmul.f32 %v24, %v30
    %v33 = vrcp.pop 6.0
    %v34 = vmul.f32 6.0, %v33
    %v35 = vsub.f32 1.0, %v34
    %v36 = vmul.f32 %v33, %v35
    %v37 = vadd.f32 %v33, %v36
    %vm38 = vweird.f32 %v33
    %v39 = vsel %vm38, %v33, %v37
    %v40 = vmul.f32 %v31, %v39
    %v41 = vmul.f32 %v32, %v39
    %42 = vst [vmem:[#allocation5] sm:$0xff] %v40
    %43 = vst [vmem:[#allocation5 + $0x8] sm:$0xff] %v41
    // Predicated region
    $region10: #{tpu_custom_call.1} parent=1 // pred_check
      _
    $region11: #{tpu_custom_call.1} parent=1 // pred_check_branch
      %45 = sbr.rel (0) target = $region13
    $region12: #{tpu_custom_call.1} parent=1 // pred_region
      %47 = vsyncadd [#allocation4], 0
      %s49 = sshll.u32 [#allocation5], 4
      %s50 = int_to_ptr.vmem [resolvable:$true] %s49
      %s51 = sshll.u32 %s1, 4
      %s52 = int_to_ptr.hbm [resolvable:$true] %s51
      %54 = dma.vmem_to_hbm [thread:$0]  %s50, 256, %s52, [#allocation4]
    $region13: #{tpu_custom_call.1} parent=1 // pred_fallthru
      _
    // Predicated region
    $region14: #{tpu_custom_call.1} parent=1 // pred_check
      _
    $region15: #{tpu_custom_call.1} parent=1 // pred_check_branch
      %56 = sbr.rel (0) target = $region17
    $region16: #{tpu_custom_call.1} parent=1 // pred_region
      %58 = dma.done [#allocation4], 256
    $region17: #{tpu_custom_call.1} parent=1 // pred_fallthru
      _
    %59 = vsyncpa [#allocation3], 1
    %60 = vsyncpa [#allocation4], 1

</llo_original>
